<compile_context>
chip_gen: v7x
topology: tpu7x:2x2x1
jax: 0.10.0
libtpu: 0.0.40
codegen_flags: <defaults>
</compile_context>

<pallas_src>
import functools

import numpy as np
import jax
import jax.numpy as jnp
from jax.experimental import pallas as pl
from jax.experimental.pallas import tpu as pltpu

FEAT = 128        # state feature width (input of Linear(128, 90))
H1_RAW = 90       # true first-hidden width
H1_PAD = 128      # padded to full lane width (zero padding -> semantics preserved)
Z_SIZE = 32
TILE_TARGET = 512  # target rows per batch tile (review: 512-1024 amortizes step overhead)


# --------------------------------------------------------------------------------------
# Kernel
# --------------------------------------------------------------------------------------
def _encoder_fwd_kernel(num_tiles, tile_b, last_rows,
                        state_ref,
                        ew1, eb1, ew2, eb2, ew3, eb3,      # encoder params
                        dw1, db1, dw2, db2, dw3, db3,      # decoder params
                        z_ref, sse_ref):
    i = pl.program_id(0)

    # uint8 -> f32 (raw 0..255 units).  No 1/255 multiply: the normalization is folded
    # into ew1 and the 255x back-scale into dw3/db3 at pack time.
    x_f32 = state_ref[...].astype(jnp.float32)           # raw units, kept for the MSE term
    x_b16 = x_f32.astype(jnp.bfloat16)                    # exact: integers 0..255 fit in bf16

    def dense(a, w_ref, b_ref, relu):
        # bf16 MXU matmul with f32 accumulation; bias-add / ReLU in f32 (v5e-safe).
        y = jnp.dot(a.astype(jnp.bfloat16), w_ref[...],
                    preferred_element_type=jnp.float32) + b_ref[...]
        return jnp.maximum(y, 0.0) if relu else y

    # ---- encoder MLP: 128 -> 90(padded 128) -> 64 -> 32, ReLU after each layer ----
    h = dense(x_b16, ew1, eb1, True)      # ew1 pre-scaled by 1/255 -> normalized units
    h = dense(h, ew2, eb2, True)
    z = dense(h, ew3, eb3, True)

    # z_layer treated as identity (see TODO at top of file).
    z_ref[...] = z

    # ---- decoder MLP: 32 -> 32 -> 64 -> 128 (ReLU, ReLU, no final activation) ----
    d = dense(z, dw1, db1, True)
    d = dense(d, dw2, db2, True)
    x_hat = dense(d, dw3, db3, False)     # dw3/db3 pre-scaled by 255 -> raw pixel units

    # ---- per-tile partial sum-of-squared-error (raw units; wrapper divides by 255^2) ----
    err = x_hat - x_f32
    sq = err * err

    if last_rows == tile_b:
        # Batch divides evenly into tiles: no masking anywhere (trace-time decision).
        sse_ref[...] = jnp.sum(sq, axis=0, keepdims=True).reshape(1, 1, FEAT)
    else:
        @pl.when(i < num_tiles - 1)
        def _():
            # Full tiles: plain sum, no iota/cmp/select VPU filler.
            sse_ref[...] = jnp.sum(sq, axis=0, keepdims=True).reshape(1, 1, FEAT)

        @pl.when(i == num_tiles - 1)
        def _():
            # Ragged last tile: mask out the zero-padded rows.
            row = jax.lax.broadcasted_iota(jnp.int32, (tile_b, FEAT), 0)
            msq = jnp.where(row < last_rows, sq, 0.0)
            sse_ref[...] = jnp.sum(msq, axis=0, keepdims=True).reshape(1, 1, FEAT)


# --------------------------------------------------------------------------------------
# Tile selection
# --------------------------------------------------------------------------------------
def _round_up(x, m):
    return ((x + m - 1) // m) * m


def _pick_tile_b(batch):
    """Large tiles (amortize per-step overhead / MXU weight re-latch), but keep >= 2 tiles
    and an even tile count when the batch is big, so both v7x TensorCores get equal work."""
    if batch <= 16:
        return max(8, _round_up(batch, 8))
    if batch <= 2 * TILE_TARGET:
        return _round_up(pl.cdiv(batch, 2), 8)        # exactly two tiles
    n_tiles = pl.cdiv(batch, TILE_TARGET)
    n_tiles += n_tiles % 2                            # even tile count (v7x megacore)
    return _round_up(pl.cdiv(batch, n_tiles), 8)


# --------------------------------------------------------------------------------------
# Wrapper
# --------------------------------------------------------------------------------------
def encoder_forward(state, params, *, tile_b=None):
    """state: [B, 128] (uint8 or float raw pixels, pre-normalization).
    Returns (z [B, 32] f32, r_loss scalar f32) matching encoder.forward semantics."""
    B, F = state.shape
    assert F == FEAT
    if tile_b is None:
        tile_b = _pick_tile_b(B)
    assert tile_b % 8 == 0, "batch tile must be a multiple of 8 (sublane packing)"

    num_tiles = pl.cdiv(B, tile_b)
    padded_b = num_tiles * tile_b
    if padded_b != B:
        state = jnp.pad(state, ((0, padded_b - B), (0, 0)))
    last_rows = B - (num_tiles - 1) * tile_b          # valid rows in the final tile

    kernel = functools.partial(_encoder_fwd_kernel, num_tiles, tile_b, last_rows)

    state_spec = pl.BlockSpec((tile_b, FEAT), lambda i: (i, 0))
    # Weights/biases: full-array blocks, constant index_map -> VMEM-resident across tiles.
    param_specs = [pl.BlockSpec(p.shape, lambda i: (0, 0)) for p in params]

    weight_bytes = sum(int(np.prod(p.shape)) * p.dtype.itemsize for p in params)
    flops_per_row = 2 * (FEAT * H1_PAD + H1_PAD * 64 + 64 * Z_SIZE
                         + Z_SIZE * 32 + 32 * 64 + 64 * FEAT)

    z, sse = pl.pallas_call(
        kernel,
        grid=(num_tiles,),
        in_specs=[state_spec] + param_specs,
        out_shape=(
            jax.ShapeDtypeStruct((padded_b, Z_SIZE), jnp.float32),
            jax.ShapeDtypeStruct((num_tiles, 1, FEAT), jnp.float32),
        ),
        out_specs=(
            # (tile_b, 32) block spans the full 32-wide output array -> contiguous HBM
            # writeback; see header note on why the lane-dense reshape was not applied.
            pl.BlockSpec((tile_b, Z_SIZE), lambda i: (i, 0)),
            pl.BlockSpec((1, 1, FEAT), lambda i: (i, 0, 0)),
        ),
        compiler_params=pltpu.CompilerParams(
            dimension_semantics=("parallel",),
        ),
        cost_estimate=pl.CostEstimate(
            flops=flops_per_row * padded_b,
            transcendentals=0,
            bytes_accessed=padded_b * (FEAT * state.dtype.itemsize + Z_SIZE * 4)
                           + num_tiles * FEAT * 4 + weight_bytes,
        ),
    )(state, *params)

    # SSE was accumulated in raw-pixel units (255x), so divide the mean by 255^2.
    r_loss = jnp.sum(sse) / jnp.float32(B * FEAT) * jnp.float32(1.0 / (255.0 * 255.0))
    return z[:B], r_loss


# --------------------------------------------------------------------------------------
# Parameters (synthetic, nn.Linear-shaped) + packing
#   (pad 90->128, fold 1/255 into w1 and 255 into the last decoder layer, cast to bf16)
# --------------------------------------------------------------------------------------
def init_params(key):
    """Weights stored [in, out] (transpose of PyTorch's [out, in]); biases [1, out]."""
    dims = [(128, 90), (90, 64), (64, 32),      # encoder
            (32, 32), (32, 64), (64, 128)]      # decoder
    raw = []
    for fan_in, fan_out in dims:
        key, kw, kb = jax.random.split(key, 3)
        bound = 1.0 / float(np.sqrt(fan_in))
        w = jax.random.uniform(kw, (fan_in, fan_out), jnp.float32, -bound, bound)
        b = jax.random.uniform(kb, (1, fan_out), jnp.float32, -bound, bound)
        raw.append((w, b))
    return raw


def pack_params(raw):
    """Zero-pad the 90-wide hidden dim to 128, fold the 1/255 state normalization into the
    first layer and the 255x back-scale into the last decoder layer, cast weights to bf16
    (biases stay f32)."""
    (w1, b1), (w2, b2), (w3, b3), (v1, c1), (v2, c2), (v3, c3) = raw
    w1 = w1 * (1.0 / 255.0)                       # fold state normalization into layer 1
    w1 = jnp.pad(w1, ((0, 0), (0, H1_PAD - H1_RAW)))
    b1 = jnp.pad(b1, ((0, 0), (0, H1_PAD - H1_RAW)))
    w2 = jnp.pad(w2, ((0, H1_PAD - H1_RAW), (0, 0)))
    v3 = v3 * 255.0                               # decoder output in raw-pixel units
    c3 = c3 * 255.0
    packed = []
    for w, b in [(w1, b1), (w2, b2), (w3, b3), (v1, c1), (v2, c2), (v3, c3)]:
        packed += [w.astype(jnp.bfloat16), b.astype(jnp.float32)]
    return packed


# --------------------------------------------------------------------------------------
# Pure-JAX f32 reference of the original forward (for correctness check)
# --------------------------------------------------------------------------------------
def encoder_forward_ref(state, raw_params):
    x = state.astype(jnp.float32) / 255.0
    (w1, b1), (w2, b2), (w3, b3), (v1, c1), (v2, c2), (v3, c3) = raw_params
    h = jax.nn.relu(x @ w1 + b1)
    h = jax.nn.relu(h @ w2 + b2)
    z = jax.nn.relu(h @ w3 + b3)
    d = jax.nn.relu(z @ v1 + c1)
    d = jax.nn.relu(d @ v2 + c2)
    x_hat = d @ v3 + c3
    return z, jnp.mean((x_hat - x) ** 2)


# --------------------------------------------------------------------------------------
if __name__ == "__main__":
    key = jax.random.PRNGKey(0)
    k_state, k_state2, k_params = jax.random.split(key, 3)

    raw_params = init_params(k_params)
    params = pack_params(raw_params)

    fwd = jax.jit(lambda s, p: encoder_forward(s, p))

    # --- small case: batch=8, feature dim 128, uint8 pixels (single tile, no masking) ---
    state = jax.random.randint(k_state, (8, FEAT), 0, 256, dtype=jnp.int32).astype(jnp.uint8)
    z, r_loss = fwd(state, params)
    jax.block_until_ready((z, r_loss))

    z_ref, loss_ref = encoder_forward_ref(state, raw_params)
    assert z.shape == (8, Z_SIZE)
    assert bool(jnp.all(z >= -1e-6))                     # final encoder ReLU
    assert bool(jnp.isfinite(r_loss))
    np.testing.assert_allclose(np.asarray(z), np.asarray(z_ref), rtol=5e-2, atol=3e-2)
    np.testing.assert_allclose(float(r_loss), float(loss_ref), rtol=1e-1, atol=1e-2)

    # --- multi-tile case: batch=260 -> 2 tiles of 136 rows, ragged (masked) last tile ---
    state2 = jax.random.randint(k_state2, (260, FEAT), 0, 256, dtype=jnp.int32).astype(jnp.uint8)
    z2, r_loss2 = fwd(state2, params)
    jax.block_until_ready((z2, r_loss2))

    z2_ref, loss2_ref = encoder_forward_ref(state2, raw_params)
    assert z2.shape == (260, Z_SIZE)
    np.testing.assert_allclose(np.asarray(z2), np.asarray(z2_ref), rtol=5e-2, atol=3e-2)
    np.testing.assert_allclose(float(r_loss2), float(loss2_ref), rtol=1e-1, atol=1e-2)

    print("KERNEL_OK")
</pallas_src>

<mosaic_0001>
module attributes {stable_mosaic.version = 11 : i64} {
  func.func @_encoder_fwd_kernel(%arg0: i32, %arg1: memref<8x128xi8, #tpu.memory_space<vmem>>, %arg2: memref<128x128xbf16, #tpu.memory_space<vmem>>, %arg3: memref<1x128xf32, #tpu.memory_space<vmem>>, %arg4: memref<128x64xbf16, #tpu.memory_space<vmem>>, %arg5: memref<1x64xf32, #tpu.memory_space<vmem>>, %arg6: memref<64x32xbf16, #tpu.memory_space<vmem>>, %arg7: memref<1x32xf32, #tpu.memory_space<vmem>>, %arg8: memref<32x32xbf16, #tpu.memory_space<vmem>>, %arg9: memref<1x32xf32, #tpu.memory_space<vmem>>, %arg10: memref<32x64xbf16, #tpu.memory_space<vmem>>, %arg11: memref<1x64xf32, #tpu.memory_space<vmem>>, %arg12: memref<64x128xbf16, #tpu.memory_space<vmem>>, %arg13: memref<1x128xf32, #tpu.memory_space<vmem>>, %arg14: memref<8x32xf32, #tpu.memory_space<vmem>>, %arg15: memref<1x1x128xf32, #tpu.memory_space<vmem>>) attributes {dimension_semantics = [#tpu.dimension_semantics<parallel>], iteration_bounds = array<i64: 1>, scalar_prefetch = 0 : i64, scratch_operands = 0 : i64, tpu.core_type = #tpu.core_type<tc>, window_params = [{transform_indices = @transform_0, window_bounds = array<i64: 8, 128>}, {pipeline_mode = #tpu.pipeline_mode<synchronous>, transform_indices = @transform_1, window_bounds = array<i64: 128, 128>}, {pipeline_mode = #tpu.pipeline_mode<synchronous>, transform_indices = @transform_2, window_bounds = array<i64: 1, 128>}, {pipeline_mode = #tpu.pipeline_mode<synchronous>, transform_indices = @transform_3, window_bounds = array<i64: 128, 64>}, {pipeline_mode = #tpu.pipeline_mode<synchronous>, transform_indices = @transform_4, window_bounds = array<i64: 1, 64>}, {pipeline_mode = #tpu.pipeline_mode<synchronous>, transform_indices = @transform_5, window_bounds = array<i64: 64, 32>}, {pipeline_mode = #tpu.pipeline_mode<synchronous>, transform_indices = @transform_6, window_bounds = array<i64: 1, 32>}, {pipeline_mode = #tpu.pipeline_mode<synchronous>, transform_indices = @transform_7, window_bounds = array<i64: 32, 32>}, {pipeline_mode = #tpu.pipeline_mode<synchronous>, transform_indices = @transform_8, window_bounds = array<i64: 1, 32>}, {pipeline_mode = #tpu.pipeline_mode<synchronous>, transform_indices = @transform_9, window_bounds = array<i64: 32, 64>}, {pipeline_mode = #tpu.pipeline_mode<synchronous>, transform_indices = @transform_10, window_bounds = array<i64: 1, 64>}, {pipeline_mode = #tpu.pipeline_mode<synchronous>, transform_indices = @transform_11, window_bounds = array<i64: 64, 128>}, {pipeline_mode = #tpu.pipeline_mode<synchronous>, transform_indices = @transform_12, window_bounds = array<i64: 1, 128>}, {transform_indices = @transform_13, window_bounds = array<i64: 8, 32>}, {transform_indices = @transform_14, window_bounds = array<i64: 1, 1, 128>}]} {
    %c0 = arith.constant 0 : index
    %c0_0 = arith.constant 0 : index
    %0 = vector.load %arg1[%c0, %c0_0] : memref<8x128xi8, #tpu.memory_space<vmem>>, vector<8x128xi8>
    %1 = arith.uitofp %0 : vector<8x128xi8> to vector<8x128xf32>
    %2 = arith.truncf %1 : vector<8x128xf32> to vector<8x128xbf16>
    %c0_1 = arith.constant 0 : index
    %c0_2 = arith.constant 0 : index
    %3 = vector.load %arg2[%c0_1, %c0_2] : memref<128x128xbf16, #tpu.memory_space<vmem>>, vector<128x128xbf16>
    %cst = arith.constant dense<0.000000e+00> : vector<8x128xf32>
    %4 = tpu.matmul %2, %3, %cst {dimension_numbers = #tpu.dot_dimension_numbers<[1], [0], [0], [1], [0, 0, 1, 1], [], []>} : vector<8x128xbf16>, vector<128x128xbf16>, vector<8x128xf32> -> vector<8x128xf32>
    %c0_3 = arith.constant 0 : index
    %c0_4 = arith.constant 0 : index
    %5 = vector.load %arg3[%c0_3, %c0_4] : memref<1x128xf32, #tpu.memory_space<vmem>>, vector<1x128xf32>
    %6 = vector.broadcast %5 : vector<1x128xf32> to vector<8x128xf32>
    %7 = arith.addf %4, %6 : vector<8x128xf32>
    %cst_5 = arith.constant 0.000000e+00 : f32
    %8 = vector.broadcast %cst_5 : f32 to vector<8x128xf32>
    %9 = arith.maximumf %7, %8 : vector<8x128xf32>
    %10 = arith.truncf %9 : vector<8x128xf32> to vector<8x128xbf16>
    %c0_6 = arith.constant 0 : index
    %c0_7 = arith.constant 0 : index
    %11 = vector.load %arg4[%c0_6, %c0_7] : memref<128x64xbf16, #tpu.memory_space<vmem>>, vector<128x64xbf16>
    %cst_8 = arith.constant dense<0.000000e+00> : vector<8x64xf32>
    %12 = tpu.matmul %10, %11, %cst_8 {dimension_numbers = #tpu.dot_dimension_numbers<[1], [0], [0], [1], [0, 0, 1, 1], [], []>} : vector<8x128xbf16>, vector<128x64xbf16>, vector<8x64xf32> -> vector<8x64xf32>
    %c0_9 = arith.constant 0 : index
    %c0_10 = arith.constant 0 : index
    %13 = vector.load %arg5[%c0_9, %c0_10] : memref<1x64xf32, #tpu.memory_space<vmem>>, vector<1x64xf32>
    %14 = vector.broadcast %13 : vector<1x64xf32> to vector<8x64xf32>
    %15 = arith.addf %12, %14 : vector<8x64xf32>
    %cst_11 = arith.constant 0.000000e+00 : f32
    %16 = vector.broadcast %cst_11 : f32 to vector<8x64xf32>
    %17 = arith.maximumf %15, %16 : vector<8x64xf32>
    %18 = arith.truncf %17 : vector<8x64xf32> to vector<8x64xbf16>
    %c0_12 = arith.constant 0 : index
    %c0_13 = arith.constant 0 : index
    %19 = vector.load %arg6[%c0_12, %c0_13] : memref<64x32xbf16, #tpu.memory_space<vmem>>, vector<64x32xbf16>
    %cst_14 = arith.constant dense<0.000000e+00> : vector<8x32xf32>
    %20 = tpu.matmul %18, %19, %cst_14 {dimension_numbers = #tpu.dot_dimension_numbers<[1], [0], [0], [1], [0, 0, 1, 1], [], []>} : vector<8x64xbf16>, vector<64x32xbf16>, vector<8x32xf32> -> vector<8x32xf32>
    %c0_15 = arith.constant 0 : index
    %c0_16 = arith.constant 0 : index
    %21 = vector.load %arg7[%c0_15, %c0_16] : memref<1x32xf32, #tpu.memory_space<vmem>>, vector<1x32xf32>
    %22 = vector.broadcast %21 : vector<1x32xf32> to vector<8x32xf32>
    %23 = arith.addf %20, %22 : vector<8x32xf32>
    %cst_17 = arith.constant 0.000000e+00 : f32
    %24 = vector.broadcast %cst_17 : f32 to vector<8x32xf32>
    %25 = arith.maximumf %23, %24 : vector<8x32xf32>
    %c0_18 = arith.constant 0 : index
    %c0_19 = arith.constant 0 : index
    %26 = vector.load %arg14[%c0_18, %c0_19] : memref<8x32xf32, #tpu.memory_space<vmem>>, vector<8x32xf32>
    tpu.vector_store %arg14[%c0_18, %c0_19], %25 {strides = array<i32>} : memref<8x32xf32, #tpu.memory_space<vmem>>, vector<8x32xf32>,
    %27 = arith.truncf %25 : vector<8x32xf32> to vector<8x32xbf16>
    %c0_20 = arith.constant 0 : index
    %c0_21 = arith.constant 0 : index
    %28 = vector.load %arg8[%c0_20, %c0_21] : memref<32x32xbf16, #tpu.memory_space<vmem>>, vector<32x32xbf16>
    %cst_22 = arith.constant dense<0.000000e+00> : vector<8x32xf32>
    %29 = tpu.matmul %27, %28, %cst_22 {dimension_numbers = #tpu.dot_dimension_numbers<[1], [0], [0], [1], [0, 0, 1, 1], [], []>} : vector<8x32xbf16>, vector<32x32xbf16>, vector<8x32xf32> -> vector<8x32xf32>
    %c0_23 = arith.constant 0 : index
    %c0_24 = arith.constant 0 : index
    %30 = vector.load %arg9[%c0_23, %c0_24] : memref<1x32xf32, #tpu.memory_space<vmem>>, vector<1x32xf32>
    %31 = vector.broadcast %30 : vector<1x32xf32> to vector<8x32xf32>
    %32 = arith.addf %29, %31 : vector<8x32xf32>
    %cst_25 = arith.constant 0.000000e+00 : f32
    %33 = vector.broadcast %cst_25 : f32 to vector<8x32xf32>
    %34 = arith.maximumf %32, %33 : vector<8x32xf32>
    %35 = arith.truncf %34 : vector<8x32xf32> to vector<8x32xbf16>
    %c0_26 = arith.constant 0 : index
    %c0_27 = arith.constant 0 : index
    %36 = vector.load %arg10[%c0_26, %c0_27] : memref<32x64xbf16, #tpu.memory_space<vmem>>, vector<32x64xbf16>
    %cst_28 = arith.constant dense<0.000000e+00> : vector<8x64xf32>
    %37 = tpu.matmul %35, %36, %cst_28 {dimension_numbers = #tpu.dot_dimension_numbers<[1], [0], [0], [1], [0, 0, 1, 1], [], []>} : vector<8x32xbf16>, vector<32x64xbf16>, vector<8x64xf32> -> vector<8x64xf32>
    %c0_29 = arith.constant 0 : index
    %c0_30 = arith.constant 0 : index
    %38 = vector.load %arg11[%c0_29, %c0_30] : memref<1x64xf32, #tpu.memory_space<vmem>>, vector<1x64xf32>
    %39 = vector.broadcast %38 : vector<1x64xf32> to vector<8x64xf32>
    %40 = arith.addf %37, %39 : vector<8x64xf32>
    %cst_31 = arith.constant 0.000000e+00 : f32
    %41 = vector.broadcast %cst_31 : f32 to vector<8x64xf32>
    %42 = arith.maximumf %40, %41 : vector<8x64xf32>
    %43 = arith.truncf %42 : vector<8x64xf32> to vector<8x64xbf16>
    %c0_32 = arith.constant 0 : index
    %c0_33 = arith.constant 0 : index
    %44 = vector.load %arg12[%c0_32, %c0_33] : memref<64x128xbf16, #tpu.memory_space<vmem>>, vector<64x128xbf16>
    %cst_34 = arith.constant dense<0.000000e+00> : vector<8x128xf32>
    %45 = tpu.matmul %43, %44, %cst_34 {dimension_numbers = #tpu.dot_dimension_numbers<[1], [0], [0], [1], [0, 0, 1, 1], [], []>} : vector<8x64xbf16>, vector<64x128xbf16>, vector<8x128xf32> -> vector<8x128xf32>
    %c0_35 = arith.constant 0 : index
    %c0_36 = arith.constant 0 : index
    %46 = vector.load %arg13[%c0_35, %c0_36] : memref<1x128xf32, #tpu.memory_space<vmem>>, vector<1x128xf32>
    %47 = vector.broadcast %46 : vector<1x128xf32> to vector<8x128xf32>
    %48 = arith.addf %45, %47 : vector<8x128xf32>
    %49 = arith.subf %48, %1 : vector<8x128xf32>
    %50 = arith.mulf %49, %49 : vector<8x128xf32>
    %cst_37 = arith.constant dense<0.000000e+00> : vector<128xf32>
    %51 = vector.multi_reduction <add>, %50, %cst_37 [0] : vector<8x128xf32> to vector<128xf32>
    %52 = vector.shape_cast %51 : vector<128xf32> to vector<1x128xf32>
    %53 = vector.shape_cast %52 : vector<1x128xf32> to vector<1x1x128xf32>
    %c0_38 = arith.constant 0 : index
    %c0_39 = arith.constant 0 : index
    %c0_40 = arith.constant 0 : index
    %54 = vector.load %arg15[%c0_38, %c0_39, %c0_40] : memref<1x1x128xf32, #tpu.memory_space<vmem>>, vector<1x1x128xf32>
    tpu.vector_store %arg15[%c0_38, %c0_39, %c0_40], %53 {strides = array<i32>} : memref<1x1x128xf32, #tpu.memory_space<vmem>>, vector<1x1x128xf32>,
    return
  }
  func.func @transform_0(%arg0: i32) -> (i32, i32) {
    %c0_i32 = arith.constant 0 : i32
    %c0_i32_0 = arith.constant 0 : i32
    return %arg0, %c0_i32 : i32, i32
  }
  func.func @transform_1(%arg0: i32) -> (i32, i32) {
    %c0_i32 = arith.constant 0 : i32
    %c0_i32_0 = arith.constant 0 : i32
    %c0_i32_1 = arith.constant 0 : i32
    return %c0_i32, %c0_i32_0 : i32, i32
  }
  func.func @transform_2(%arg0: i32) -> (i32, i32) {
    %c0_i32 = arith.constant 0 : i32
    %c0_i32_0 = arith.constant 0 : i32
    %c0_i32_1 = arith.constant 0 : i32
    return %c0_i32, %c0_i32_0 : i32, i32
  }
  func.func @transform_3(%arg0: i32) -> (i32, i32) {
    %c0_i32 = arith.constant 0 : i32
    %c0_i32_0 = arith.constant 0 : i32
    %c0_i32_1 = arith.constant 0 : i32
    return %c0_i32, %c0_i32_0 : i32, i32
  }
  func.func @transform_4(%arg0: i32) -> (i32, i32) {
    %c0_i32 = arith.constant 0 : i32
    %c0_i32_0 = arith.constant 0 : i32
    %c0_i32_1 = arith.constant 0 : i32
    return %c0_i32, %c0_i32_0 : i32, i32
  }
  func.func @transform_5(%arg0: i32) -> (i32, i32) {
    %c0_i32 = arith.constant 0 : i32
    %c0_i32_0 = arith.constant 0 : i32
    %c0_i32_1 = arith.constant 0 : i32
    return %c0_i32, %c0_i32_0 : i32, i32
  }
  func.func @transform_6(%arg0: i32) -> (i32, i32) {
    %c0_i32 = arith.constant 0 : i32
    %c0_i32_0 = arith.constant 0 : i32
    %c0_i32_1 = arith.constant 0 : i32
    return %c0_i32, %c0_i32_0 : i32, i32
  }
  func.func @transform_7(%arg0: i32) -> (i32, i32) {
    %c0_i32 = arith.constant 0 : i32
    %c0_i32_0 = arith.constant 0 : i32
    %c0_i32_1 = arith.constant 0 : i32
    return %c0_i32, %c0_i32_0 : i32, i32
  }
  func.func @transform_8(%arg0: i32) -> (i32, i32) {
    %c0_i32 = arith.constant 0 : i32
    %c0_i32_0 = arith.constant 0 : i32
    %c0_i32_1 = arith.constant 0 : i32
    return %c0_i32, %c0_i32_0 : i32, i32
  }
  func.func @transform_9(%arg0: i32) -> (i32, i32) {
    %c0_i32 = arith.constant 0 : i32
    %c0_i32_0 = arith.constant 0 : i32
    %c0_i32_1 = arith.constant 0 : i32
    return %c0_i32, %c0_i32_0 : i32, i32
  }
  func.func @transform_10(%arg0: i32) -> (i32, i32) {
    %c0_i32 = arith.constant 0 : i32
    %c0_i32_0 = arith.constant 0 : i32
    %c0_i32_1 = arith.constant 0 : i32
    return %c0_i32, %c0_i32_0 : i32, i32
  }
  func.func @transform_11(%arg0: i32) -> (i32, i32) {
    %c0_i32 = arith.constant 0 : i32
    %c0_i32_0 = arith.constant 0 : i32
    %c0_i32_1 = arith.constant 0 : i32
    return %c0_i32, %c0_i32_0 : i32, i32
  }
  func.func @transform_12(%arg0: i32) -> (i32, i32) {
    %c0_i32 = arith.constant 0 : i32
    %c0_i32_0 = arith.constant 0 : i32
    %c0_i32_1 = arith.constant 0 : i32
    return %c0_i32, %c0_i32_0 : i32, i32
  }
  func.func @transform_13(%arg0: i32) -> (i32, i32) {
    %c0_i32 = arith.constant 0 : i32
    %c0_i32_0 = arith.constant 0 : i32
    return %arg0, %c0_i32 : i32, i32
  }
  func.func @transform_14(%arg0: i32) -> (i32, i32, i32) {
    %c0_i32 = arith.constant 0 : i32
    %c0_i32_0 = arith.constant 0 : i32
    %c0_i32_1 = arith.constant 0 : i32
    return %arg0, %c0_i32, %c0_i32_0 : i32, i32, i32
  }
}

</mosaic_0001>

<llo_original>
// kernel: _lambda_.1
$region0: #{_lambda_.1}
  #allocation0 [shape = 'u32[]', space=smem, size = 0x4, offset = 0x4, fixed_abs, tag = 'smem constant byte address 0x4 - core index']
  #allocation1 [shape = 'u32[144,128]{1,0:T(1,128)}', space=vmem, size = 0x12000, scoped, tag = 'internal scratch']
  %s0 = inlined_call_operand.vmem [shape: u8[8,128], index: 0, kind: input, shape index: {}]
  %s1 = inlined_call_operand.vmem [shape: bf16[128,128], index: 1, kind: input, shape index: {}]
  %s2 = inlined_call_operand.hbm [shape: f32[1,128], index: 2, kind: input, shape index: {}]
  %s3 = inlined_call_operand.vmem [shape: bf16[128,64], index: 3, kind: input, shape index: {}]
  %s4 = inlined_call_operand.hbm [shape: f32[1,64], index: 4, kind: input, shape index: {}]
  %s5 = inlined_call_operand.vmem [shape: bf16[64,32], index: 5, kind: input, shape index: {}]
  %s6 = inlined_call_operand.hbm [shape: f32[1,32], index: 6, kind: input, shape index: {}]
  %s7 = inlined_call_operand.vmem [shape: bf16[32,32], index: 7, kind: input, shape index: {}]
  %s8 = inlined_call_operand.hbm [shape: f32[1,32], index: 8, kind: input, shape index: {}]
  %s9 = inlined_call_operand.vmem [shape: bf16[32,64], index: 9, kind: input, shape index: {}]
  %s10 = inlined_call_operand.vmem [shape: f32[1,64], index: 10, kind: input, shape index: {}]
  %s11 = inlined_call_operand.vmem [shape: bf16[64,128], index: 11, kind: input, shape index: {}]
  %s12 = inlined_call_operand.vmem [shape: f32[1,128], index: 12, kind: input, shape index: {}]
  %s13 = inlined_call_operand.hbm [shape: f32[8,32], index: 13, kind: output, shape index: {0}]
  %s14 = inlined_call_operand.vmem [shape: f32[1,1,128], index: 14, kind: output, shape index: {1}]
  %15 = xla_tuple %s13, %s14
  %s16 = sld [smem:[#allocation0]]
  $region86: #{_lambda_.1} parent=0
    _
  %s18 = ssub.s32 1, %s16
  %s19 = scalar_select 0, %s18, %s16
  $region1: #{_lambda_.1} parent=0
    #allocation2 [shape = 'u8[512]{0}', space=vmem, size = 0x400, scoped, tag = 'input window, operand 2, single buffered']
    #allocation3 [shape = 's32[1]{0}', space=sflag, size = 0x4, scoped, tag = 'scoped memory for _lambda_.1']
    #allocation4 [shape = 's32[1]{0}', space=sflag, size = 0x4, scoped, tag = 'scoped memory for _lambda_.1']
    #allocation5 [shape = 'u8[512]{0}', space=vmem, size = 0x400, scoped, tag = 'input window, operand 4, single buffered']
    #allocation6 [shape = 's32[1]{0}', space=sflag, size = 0x4, scoped, tag = 'scoped memory for _lambda_.1']
    #allocation7 [shape = 'u8[512]{0}', space=vmem, size = 0x400, scoped, tag = 'input window, operand 6, single buffered']
    #allocation8 [shape = 'u8[512]{0}', space=vmem, size = 0x400, scoped, tag = 'input window, operand 8, single buffered']
    #allocation9 [shape = 's32[1]{0}', space=sflag, size = 0x4, scoped, tag = 'scoped memory for _lambda_.1']
    #allocation10 [shape = 'u8[4096]{0}', space=vmem, size = 0x1000, scoped, tag = 'output window, operand 0, single buffered']
    %20 = vsyncpa [#allocation3], 0
    %21 = vsyncpa [#allocation6], 0
    %22 = vsyncpa [#allocation9], 0
    %23 = vsyncpa [#allocation4], 0
    // Predicated region
    $region2: #{_lambda_.1} parent=1 // pred_check
      _
    $region3: #{_lambda_.1} parent=1 // pred_check_branch
      %25 = sbr.rel (0) target = $region5
    $region4: #{_lambda_.1} parent=1 // pred_region
      _
    $region5: #{_lambda_.1} parent=1 // pred_fallthru
      _
    // Predicated region
    $region6: #{_lambda_.1} parent=1 // pred_check
      _
    $region7: #{_lambda_.1} parent=1 // pred_check_branch
      %27 = sbr.rel (0) target = $region9
    $region8: #{_lambda_.1} parent=1 // pred_region
      _
    $region9: #{_lambda_.1} parent=1 // pred_fallthru
      _
    // Predicated region
    $region10: #{_lambda_.1} parent=1 // pred_check
      _
    $region11: #{_lambda_.1} parent=1 // pred_check_branch
      %29 = sbr.rel (0) target = $region13
    $region12: #{_lambda_.1} parent=1 // pred_region
      %s31 = ssub.s32 16, 16
      %32 = vsyncadd [#allocation3], %s31
      %s34 = sshll.u32 [#allocation2], 4
      %s35 = int_to_ptr.vmem [resolvable:$true] %s34
      %37 = dma.hbm_to_vmem [thread:$0]  %s2, 16, %s35, [#allocation3]
    $region13: #{_lambda_.1} parent=1 // pred_fallthru
      _
    // Predicated region
    $region14: #{_lambda_.1} parent=1 // pred_check
      _
    $region15: #{_lambda_.1} parent=1 // pred_check_branch
      %39 = sbr.rel (0) target = $region17
    $region16: #{_lambda_.1} parent=1 // pred_region
      _
    $region17: #{_lambda_.1} parent=1 // pred_fallthru
      _
    // Predicated region
    $region18: #{_lambda_.1} parent=1 // pred_check
      _
    $region19: #{_lambda_.1} parent=1 // pred_check_branch
      %41 = sbr.rel (0) target = $region21
    $region20: #{_lambda_.1} parent=1 // pred_region
      %s43 = ssub.s32 16, 16
      %44 = vsyncadd [#allocation6], %s43
      %s46 = sshll.u32 [#allocation5], 4
      %s47 = int_to_ptr.vmem [resolvable:$true] %s46
      %49 = dma.hbm_to_vmem [thread:$0]  %s4, 16, %s47, [#allocation6]
    $region21: #{_lambda_.1} parent=1 // pred_fallthru
      _
    // Predicated region
    $region22: #{_lambda_.1} parent=1 // pred_check
      _
    $region23: #{_lambda_.1} parent=1 // pred_check_branch
      %51 = sbr.rel (0) target = $region25
    $region24: #{_lambda_.1} parent=1 // pred_region
      _
    $region25: #{_lambda_.1} parent=1 // pred_fallthru
      _
    // Predicated region
    $region26: #{_lambda_.1} parent=1 // pred_check
      _
    $region27: #{_lambda_.1} parent=1 // pred_check_branch
      %53 = sbr.rel (0) target = $region29
    $region28: #{_lambda_.1} parent=1 // pred_region
      %s55 = ssub.s32 16, 16
      %56 = vsyncadd [#allocation6], %s55
      %s58 = sshll.u32 [#allocation7], 4
      %s59 = int_to_ptr.vmem [resolvable:$true] %s58
      %61 = dma.hbm_to_vmem [thread:$0]  %s6, 16, %s59, [#allocation6]
    $region29: #{_lambda_.1} parent=1 // pred_fallthru
      _
    // Predicated region
    $region30: #{_lambda_.1} parent=1 // pred_check
      _
    $region31: #{_lambda_.1} parent=1 // pred_check_branch
      %63 = sbr.rel (0) target = $region33
    $region32: #{_lambda_.1} parent=1 // pred_region
      _
    $region33: #{_lambda_.1} parent=1 // pred_fallthru
      _
    // Predicated region
    $region34: #{_lambda_.1} parent=1 // pred_check
      _
    $region35: #{_lambda_.1} parent=1 // pred_check_branch
      %65 = sbr.rel (0) target = $region37
    $region36: #{_lambda_.1} parent=1 // pred_region
      %s67 = ssub.s32 16, 16
      %68 = vsyncadd [#allocation9], %s67
      %s70 = sshll.u32 [#allocation8], 4
      %s71 = int_to_ptr.vmem [resolvable:$true] %s70
      %73 = dma.hbm_to_vmem [thread:$0]  %s8, 16, %s71, [#allocation9]
    $region37: #{_lambda_.1} parent=1 // pred_fallthru
      _
    // Predicated region
    $region38: #{_lambda_.1} parent=1 // pred_check
      _
    $region39: #{_lambda_.1} parent=1 // pred_check_branch
      %75 = sbr.rel (0) target = $region41
    $region40: #{_lambda_.1} parent=1 // pred_region
      _
    $region41: #{_lambda_.1} parent=1 // pred_fallthru
      _
    // Predicated region
    $region42: #{_lambda_.1} parent=1 // pred_check
      _
    $region43: #{_lambda_.1} parent=1 // pred_check_branch
      %77 = sbr.rel (0) target = $region45
    $region44: #{_lambda_.1} parent=1 // pred_region
      _
    $region45: #{_lambda_.1} parent=1 // pred_fallthru
      _
    // Predicated region
    $region46: #{_lambda_.1} parent=1 // pred_check
      _
    $region47: #{_lambda_.1} parent=1 // pred_check_branch
      %79 = sbr.rel (0) target = $region49
    $region48: #{_lambda_.1} parent=1 // pred_region
      _
    $region49: #{_lambda_.1} parent=1 // pred_fallthru
      _
    // Predicated region
    $region50: #{_lambda_.1} parent=1 // pred_check
      _
    $region51: #{_lambda_.1} parent=1 // pred_check_branch
      %81 = sbr.rel (0) target = $region53
    $region52: #{_lambda_.1} parent=1 // pred_region
      _
    $region53: #{_lambda_.1} parent=1 // pred_fallthru
      _
    // Predicated region
    $region54: #{_lambda_.1} parent=1 // pred_check
      _
    $region55: #{_lambda_.1} parent=1 // pred_check_branch
      %83 = sbr.rel (0) target = $region57
    $region56: #{_lambda_.1} parent=1 // pred_region
      %84 = dma.done [#allocation3], 16
    $region57: #{_lambda_.1} parent=1 // pred_fallthru
      _
    // Predicated region
    $region58: #{_lambda_.1} parent=1 // pred_check
      _
    $region59: #{_lambda_.1} parent=1 // pred_check_branch
      %86 = sbr.rel (0) target = $region61
    $region60: #{_lambda_.1} parent=1 // pred_region
      %87 = dma.done [#allocation6], 16
    $region61: #{_lambda_.1} parent=1 // pred_fallthru
      _
    // Predicated region
    $region62: #{_lambda_.1} parent=1 // pred_check
      _
    $region63: #{_lambda_.1} parent=1 // pred_check_branch
      %89 = sbr.rel (0) target = $region65
    $region64: #{_lambda_.1} parent=1 // pred_region
      %90 = dma.done [#allocation6], 16
    $region65: #{_lambda_.1} parent=1 // pred_fallthru
      _
    // Predicated region
    $region66: #{_lambda_.1} parent=1 // pred_check
      _
    $region67: #{_lambda_.1} parent=1 // pred_check_branch
      %92 = sbr.rel (0) target = $region69
    $region68: #{_lambda_.1} parent=1 // pred_region
      %93 = dma.done [#allocation9], 16
    $region69: #{_lambda_.1} parent=1 // pred_fallthru
      _
    %v95 = vld [vmem:[%s0] sm:$0x3]
    %v96 = vunpack.c.0.s8 %v95
    %v97 = vand.u32 %v96, 255
    %v98 = vcvt.s32.f32 %v97
    %v99 = vunpack.c.l.u8.bf16 %v95
    %v100 = vld [vmem:[%s1] sm:$0xf]
    %v101 = vld [vmem:[%s1 + $0x4] sm:$0xf]
    %v102 = vld [vmem:[%s1 + $0x8] sm:$0xf]
    %v103 = vld [vmem:[%s1 + $0xc] sm:$0xf]
    %v104 = vld [vmem:[%s1 + $0x10] sm:$0xf]
    %v105 = vld [vmem:[%s1 + $0x14] sm:$0xf]
    %v106 = vld [vmem:[%s1 + $0x18] sm:$0xf]
    %v107 = vld [vmem:[%s1 + $0x1c] sm:$0xf]
    %v108 = vld [vmem:[%s1 + $0x20] sm:$0xf]
    %v109 = vld [vmem:[%s1 + $0x24] sm:$0xf]
    %v110 = vld [vmem:[%s1 + $0x28] sm:$0xf]
    %v111 = vld [vmem:[%s1 + $0x2c] sm:$0xf]
    %v112 = vld [vmem:[%s1 + $0x30] sm:$0xf]
    %v113 = vld [vmem:[%s1 + $0x34] sm:$0xf]
    %v114 = vld [vmem:[%s1 + $0x38] sm:$0xf]
    %v115 = vld [vmem:[%s1 + $0x3c] sm:$0xf]
    %v116 = vld [vmem:[#allocation2] sm:$0x1]
    %v118 = vlaneseq
    %v119 = vshrl.u32 %v118, 7
    %v120 = vsub.s32 0, %v119
    %v121 = vrot.slane %v116, %v120
    %v139 = vunpack.c.l.b16 %v100
    %v140 = vunpack.c.l.b16 %v101
    %v141 = vunpack.c.l.b16 %v102
    %v142 = vunpack.c.l.b16 %v103
    %v143 = vunpack.c.l.b16 %v104
    %v144 = vunpack.c.l.b16 %v105
    %v145 = vunpack.c.l.b16 %v106
    %v146 = vunpack.c.l.b16 %v107
    %v147 = vunpack.c.l.b16 %v108
    %v148 = vunpack.c.l.b16 %v109
    %v149 = vunpack.c.l.b16 %v110
    %v150 = vunpack.c.l.b16 %v111
    %v151 = vunpack.c.l.b16 %v112
    %v152 = vunpack.c.l.b16 %v113
    %v153 = vunpack.c.l.b16 %v114
    %v154 = vunpack.c.l.b16 %v115
    %v155 = vpack.c.b16 %v140, %v139
    %v156 = vpack.c.b16 %v142, %v141
    %v157 = vpack.c.b16 %v144, %v143
    %v158 = vpack.c.b16 %v146, %v145
    %v159 = vpack.c.b16 %v148, %v147
    %v160 = vpack.c.b16 %v150, %v149
    %v161 = vpack.c.b16 %v152, %v151
    %v162 = vpack.c.b16 %v154, %v153
    %171 = vmatprep.subr.bf16.mxu0 0
    %172 = vmatpush1.bf16.msra.mxu0 %v155
    %173 = vmatprep.subr.bf16.mxu0 0
    %174 = vmatpush1.bf16.msra.mxu0 %v156
    %175 = vmatprep.subr.bf16.mxu0 0
    %176 = vmatpush1.bf16.msra.mxu0 %v157
    %177 = vmatprep.subr.bf16.mxu0 0
    %178 = vmatpush1.bf16.msra.mxu0 %v158
    %179 = vmatprep.subr.bf16.mxu0 0
    %180 = vmatpush1.bf16.msra.mxu0 %v159
    %181 = vmatprep.subr.bf16.mxu0 0
    %182 = vmatpush1.bf16.msra.mxu0 %v160
    %183 = vmatprep.subr.bf16.mxu0 0
    %184 = vmatpush1.bf16.msra.mxu0 %v161
    %185 = vmatprep.subr.bf16.mxu0 0
    %186 = vmatpush1.bf16.msra.mxu0 %v162
    %187 = vmatprep.subr.bf16.mxu0 0
    %188 = vmatpush1.bf16.msra.mxu0 0
    %189 = vmatprep.subr.bf16.mxu0 0
    %190 = vmatpush1.bf16.msra.mxu0 0
    %191 = vmatprep.subr.bf16.mxu0 0
    %192 = vmatpush1.bf16.msra.mxu0 0
    %193 = vmatprep.subr.bf16.mxu0 0
    %194 = vmatpush1.bf16.msra.mxu0 0
    %195 = vmatprep.subr.bf16.mxu0 0
    %196 = vmatpush1.bf16.msra.mxu0 0
    %197 = vmatprep.subr.bf16.mxu0 0
    %198 = vmatpush1.bf16.msra.mxu0 0
    %199 = vmatprep.subr.bf16.mxu0 0
    %200 = vmatpush1.bf16.msra.mxu0 0
    %201 = vmatprep.subr.bf16.mxu0 0
    %202 = vmatpush1.bf16.msra.mxu0 0
    %203 = vmatprep.mubr.bf16.mxu0 0
    %204 = vmatmul.mubr.bf16.gmra.mrb[0].mxu0 %v99
    %v205 = vpop.f32.mrb[0].mxu0
    %v206 = vadd.f32 %v121, %v205
    %v207 = vpop.f32.mrb[0].mxu0
    %v208 = vpop.f32.mrb[0].mxu0
    %v209 = vpop.f32.mrb[0].mxu0
    %210 = vdwg.mxu0
    %v211 = vmax.f32 %v206, 0.0
    %v212 = vpack.c.bf16 %v211, %v211
    %v213 = vld [vmem:[%s3] sm:$0xf]
    %v214 = vld [vmem:[%s3 + $0x4] sm:$0xf]
    %v215 = vld [vmem:[%s3 + $0x8] sm:$0xf]
    %v216 = vld [vmem:[%s3 + $0xc] sm:$0xf]
    %v217 = vld [vmem:[%s3 + $0x10] sm:$0xf]
    %v218 = vld [vmem:[%s3 + $0x14] sm:$0xf]
    %v219 = vld [vmem:[%s3 + $0x18] sm:$0xf]
    %v220 = vld [vmem:[%s3 + $0x1c] sm:$0xf]
    %v221 = vld [vmem:[%s3 + $0x20] sm:$0xf]
    %v222 = vld [vmem:[%s3 + $0x24] sm:$0xf]
    %v223 = vld [vmem:[%s3 + $0x28] sm:$0xf]
    %v224 = vld [vmem:[%s3 + $0x2c] sm:$0xf]
    %v225 = vld [vmem:[%s3 + $0x30] sm:$0xf]
    %v226 = vld [vmem:[%s3 + $0x34] sm:$0xf]
    %v227 = vld [vmem:[%s3 + $0x38] sm:$0xf]
    %v228 = vld [vmem:[%s3 + $0x3c] sm:$0xf]
    %v229 = vld [vmem:[#allocation5] sm:$0x1]
    %v231 = vlaneseq
    %v232 = vshrl.u32 %v231, 7
    %v233 = vsub.s32 0, %v232
    %v234 = vrot.slane %v229, %v233
    %v252 = vunpack.c.l.b16 %v213
    %v253 = vunpack.c.l.b16 %v214
    %v254 = vunpack.c.l.b16 %v215
    %v255 = vunpack.c.l.b16 %v216
    %v256 = vunpack.c.l.b16 %v217
    %v257 = vunpack.c.l.b16 %v218
    %v258 = vunpack.c.l.b16 %v219
    %v259 = vunpack.c.l.b16 %v220
    %v260 = vunpack.c.l.b16 %v221
    %v261 = vunpack.c.l.b16 %v222
    %v262 = vunpack.c.l.b16 %v223
    %v263 = vunpack.c.l.b16 %v224
    %v264 = vunpack.c.l.b16 %v225
    %v265 = vunpack.c.l.b16 %v226
    %v266 = vunpack.c.l.b16 %v227
    %v267 = vunpack.c.l.b16 %v228
    %v268 = vpack.c.b16 %v253, %v252
    %v269 = vpack.c.b16 %v255, %v254
    %v270 = vpack.c.b16 %v257, %v256
    %v271 = vpack.c.b16 %v259, %v258
    %v272 = vpack.c.b16 %v261, %v260
    %v273 = vpack.c.b16 %v263, %v262
    %v274 = vpack.c.b16 %v265, %v264
    %v275 = vpack.c.b16 %v267, %v266
    %284 = vmatprep.subr.bf16.mxu0 0
    %285 = vmatpush1.bf16.msra.mxu0 %v268
    %286 = vmatprep.subr.bf16.mxu0 0
    %287 = vmatpush1.bf16.msra.mxu0 %v269
    %288 = vmatprep.subr.bf16.mxu0 0
    %289 = vmatpush1.bf16.msra.mxu0 %v270
    %290 = vmatprep.subr.bf16.mxu0 0
    %291 = vmatpush1.bf16.msra.mxu0 %v271
    %292 = vmatprep.subr.bf16.mxu0 0
    %293 = vmatpush1.bf16.msra.mxu0 %v272
    %294 = vmatprep.subr.bf16.mxu0 0
    %295 = vmatpush1.bf16.msra.mxu0 %v273
    %296 = vmatprep.subr.bf16.mxu0 0
    %297 = vmatpush1.bf16.msra.mxu0 %v274
    %298 = vmatprep.subr.bf16.mxu0 0
    %299 = vmatpush1.bf16.msra.mxu0 %v275
    %300 = vmatprep.subr.bf16.mxu0 0
    %301 = vmatpush1.bf16.msra.mxu0 0
    %302 = vmatprep.subr.bf16.mxu0 0
    %303 = vmatpush1.bf16.msra.mxu0 0
    %304 = vmatprep.subr.bf16.mxu0 0
    %305 = vmatpush1.bf16.msra.mxu0 0
    %306 = vmatprep.subr.bf16.mxu0 0
    %307 = vmatpush1.bf16.msra.mxu0 0
    %308 = vmatprep.subr.bf16.mxu0 0
    %309 = vmatpush1.bf16.msra.mxu0 0
    %310 = vmatprep.subr.bf16.mxu0 0
    %311 = vmatpush1.bf16.msra.mxu0 0
    %312 = vmatprep.subr.bf16.mxu0 0
    %313 = vmatpush1.bf16.msra.mxu0 0
    %314 = vmatprep.subr.bf16.mxu0 0
    %315 = vmatpush1.bf16.msra.mxu0 0
    %316 = vmatprep.mubr.bf16.mxu0 0
    %317 = vmatmul.mubr.bf16.gmra.mrb[0].mxu0 %v212
    %v318 = vpop.f32.mrb[0].mxu0
    %v319 = vadd.f32 %v234, %v318
    %v320 = vpop.f32.mrb[0].mxu0
    %v321 = vpop.f32.mrb[0].mxu0
    %v322 = vpop.f32.mrb[0].mxu0
    %323 = vdwg.mxu0
    %v324 = vmax.f32 %v319, 0.0
    %v325 = vpack.c.bf16 %v324, %v324
    %v326 = vld [vmem:[%s5] sm:$0xf]
    %v327 = vld [vmem:[%s5 + $0x4] sm:$0xf]
    %v328 = vld [vmem:[%s5 + $0x8] sm:$0xf]
    %v329 = vld [vmem:[%s5 + $0xc] sm:$0xf]
    %v330 = vld [vmem:[%s5 + $0x10] sm:$0xf]
    %v331 = vld [vmem:[%s5 + $0x14] sm:$0xf]
    %v332 = vld [vmem:[%s5 + $0x18] sm:$0xf]
    %v333 = vld [vmem:[%s5 + $0x1c] sm:$0xf]
    %v334 = vld [vmem:[#allocation7] sm:$0x1]
    %v336 = vlaneseq
    %v337 = vshrl.u32 %v336, 7
    %v338 = vsub.s32 0, %v337
    %v339 = vrot.slane %v334, %v338
    %v349 = vunpack.c.l.b16 %v326
    %v350 = vunpack.c.l.b16 %v327
    %v351 = vunpack.c.l.b16 %v328
    %v352 = vunpack.c.l.b16 %v329
    %v353 = vunpack.c.l.b16 %v330
    %v354 = vunpack.c.l.b16 %v331
    %v355 = vunpack.c.l.b16 %v332
    %v356 = vunpack.c.l.b16 %v333
    %v357 = vpack.c.b16 %v350, %v349
    %v358 = vpack.c.b16 %v352, %v351
    %v359 = vpack.c.b16 %v354, %v353
    %v360 = vpack.c.b16 %v356, %v355
    %vm365 = vcmask 523264
    %v367 = vsel %vm365, %v325, 0
    %369 = vmatprep.subr.bf16.mxu0 0
    %370 = vmatpush1.bf16.msra.mxu0 %v357
    %371 = vmatprep.subr.bf16.mxu0 0
    %372 = vmatpush1.bf16.msra.mxu0 %v358
    %373 = vmatprep.subr.bf16.mxu0 0
    %374 = vmatpush1.bf16.msra.mxu0 %v359
    %375 = vmatprep.subr.bf16.mxu0 0
    %376 = vmatpush1.bf16.msra.mxu0 %v360
    %377 = vmatprep.subr.bf16.mxu0 0
    %378 = vmatpush1.bf16.msra.mxu0 0
    %379 = vmatprep.subr.bf16.mxu0 0
    %380 = vmatpush1.bf16.msra.mxu0 0
    %381 = vmatprep.subr.bf16.mxu0 0
    %382 = vmatpush1.bf16.msra.mxu0 0
    %383 = vmatprep.subr.bf16.mxu0 0
    %384 = vmatpush1.bf16.msra.mxu0 0
    %385 = vmatprep.subr.bf16.mxu0 0
    %386 = vmatpush1.bf16.msra.mxu0 0
    %387 = vmatprep.subr.bf16.mxu0 0
    %388 = vmatpush1.bf16.msra.mxu0 0
    %389 = vmatprep.subr.bf16.mxu0 0
    %390 = vmatpush1.bf16.msra.mxu0 0
    %391 = vmatprep.subr.bf16.mxu0 0
    %392 = vmatpush1.bf16.msra.mxu0 0
    %393 = vmatprep.subr.bf16.mxu0 0
    %394 = vmatpush1.bf16.msra.mxu0 0
    %395 = vmatprep.subr.bf16.mxu0 0
    %396 = vmatpush1.bf16.msra.mxu0 0
    %397 = vmatprep.subr.bf16.mxu0 0
    %398 = vmatpush1.bf16.msra.mxu0 0
    %399 = vmatprep.subr.bf16.mxu0 0
    %400 = vmatpush1.bf16.msra.mxu0 0
    %401 = vmatprep.mubr.bf16.mxu0 0
    %402 = vmatmul.mubr.bf16.gmra.mrb[0].mxu0 %v367
    %v403 = vpop.f32.mrb[0].mxu0
    %v404 = vadd.f32 %v339, %v403
    %v405 = vpop.f32.mrb[0].mxu0
    %v406 = vpop.f32.mrb[0].mxu0
    %v407 = vpop.f32.mrb[0].mxu0
    %408 = vdwg.mxu0
    %v409 = vmax.f32 %v404, 0.0
    %vm410 = vcmask 261120
    %411 = vst.msk [vmem:[#allocation10] sm:$0xff] %vm410, %v409
    %v412 = vpack.c.bf16 %v409, %v409
    %v413 = vld [vmem:[%s7] sm:$0xf]
    %v414 = vld [vmem:[%s7 + $0x4] sm:$0xf]
    %v415 = vld [vmem:[%s7 + $0x8] sm:$0xf]
    %v416 = vld [vmem:[%s7 + $0xc] sm:$0xf]
    %v417 = vld [vmem:[#allocation8] sm:$0x1]
    %v419 = vlaneseq
    %v420 = vshrl.u32 %v419, 7
    %v421 = vsub.s32 0, %v420
    %v422 = vrot.slane %v417, %v421
    %v428 = vunpack.c.l.b16 %v413
    %v429 = vunpack.c.l.b16 %v414
    %v430 = vunpack.c.l.b16 %v415
    %v431 = vunpack.c.l.b16 %v416
    %v432 = vpack.c.b16 %v429, %v428
    %v433 = vpack.c.b16 %v431, %v430
    %v437 = vsel %vm410, %v412, 0
    %439 = vmatprep.subr.bf16.mxu0 0
    %440 = vmatpush1.bf16.msra.mxu0 %v432
    %441 = vmatprep.subr.bf16.mxu0 0
    %442 = vmatpush1.bf16.msra.mxu0 %v433
    %443 = vmatprep.subr.bf16.mxu0 0
    %444 = vmatpush1.bf16.msra.mxu0 0
    %445 = vmatprep.subr.bf16.mxu0 0
    %446 = vmatpush1.bf16.msra.mxu0 0
    %447 = vmatprep.subr.bf16.mxu0 0
    %448 = vmatpush1.bf16.msra.mxu0 0
    %449 = vmatprep.subr.bf16.mxu0 0
    %450 = vmatpush1.bf16.msra.mxu0 0
    %451 = vmatprep.subr.bf16.mxu0 0
    %452 = vmatpush1.bf16.msra.mxu0 0
    %453 = vmatprep.subr.bf16.mxu0 0
    %454 = vmatpush1.bf16.msra.mxu0 0
    %455 = vmatprep.subr.bf16.mxu0 0
    %456 = vmatpush1.bf16.msra.mxu0 0
    %457 = vmatprep.subr.bf16.mxu0 0
    %458 = vmatpush1.bf16.msra.mxu0 0
    %459 = vmatprep.subr.bf16.mxu0 0
    %460 = vmatpush1.bf16.msra.mxu0 0
    %461 = vmatprep.subr.bf16.mxu0 0
    %462 = vmatpush1.bf16.msra.mxu0 0
    %463 = vmatprep.subr.bf16.mxu0 0
    %464 = vmatpush1.bf16.msra.mxu0 0
    %465 = vmatprep.subr.bf16.mxu0 0
    %466 = vmatpush1.bf16.msra.mxu0 0
    %467 = vmatprep.subr.bf16.mxu0 0
    %468 = vmatpush1.bf16.msra.mxu0 0
    %469 = vmatprep.subr.bf16.mxu0 0
    %470 = vmatpush1.bf16.msra.mxu0 0
    %471 = vmatprep.mubr.bf16.mxu0 0
    %472 = vmatmul.mubr.bf16.gmra.mrb[0].mxu0 %v437
    %v473 = vpop.f32.mrb[0].mxu0
    %v474 = vadd.f32 %v422, %v473
    %v475 = vpop.f32.mrb[0].mxu0
    %v476 = vpop.f32.mrb[0].mxu0
    %v477 = vpop.f32.mrb[0].mxu0
    %478 = vdwg.mxu0
    %v479 = vmax.f32 %v474, 0.0
    %v480 = vpack.c.bf16 %v479, %v479
    %v481 = vld [vmem:[%s9] sm:$0xf]
    %v482 = vld [vmem:[%s9 + $0x4] sm:$0xf]
    %v483 = vld [vmem:[%s9 + $0x8] sm:$0xf]
    %v484 = vld [vmem:[%s9 + $0xc] sm:$0xf]
    %v485 = vld [vmem:[%s10] sm:$0x1]
    %v487 = vlaneseq
    %v488 = vshrl.u32 %v487, 7
    %v489 = vsub.s32 0, %v488
    %v490 = vrot.slane %v485, %v489
    %v496 = vunpack.c.l.b16 %v481
    %v497 = vunpack.c.l.b16 %v482
    %v498 = vunpack.c.l.b16 %v483
    %v499 = vunpack.c.l.b16 %v484
    %v500 = vpack.c.b16 %v497, %v496
    %v501 = vpack.c.b16 %v499, %v498
    %v505 = vsel %vm410, %v480, 0
    %507 = vmatprep.subr.bf16.mxu0 0
    %508 = vmatpush1.bf16.msra.mxu0 %v500
    %509 = vmatprep.subr.bf16.mxu0 0
    %510 = vmatpush1.bf16.msra.mxu0 %v501
    %511 = vmatprep.subr.bf16.mxu0 0
    %512 = vmatpush1.bf16.msra.mxu0 0
    %513 = vmatprep.subr.bf16.mxu0 0
    %514 = vmatpush1.bf16.msra.mxu0 0
    %515 = vmatprep.subr.bf16.mxu0 0
    %516 = vmatpush1.bf16.msra.mxu0 0
    %517 = vmatprep.subr.bf16.mxu0 0
    %518 = vmatpush1.bf16.msra.mxu0 0
    %519 = vmatprep.subr.bf16.mxu0 0
    %520 = vmatpush1.bf16.msra.mxu0 0
    %521 = vmatprep.subr.bf16.mxu0 0
    %522 = vmatpush1.bf16.msra.mxu0 0
    %523 = vmatprep.subr.bf16.mxu0 0
    %524 = vmatpush1.bf16.msra.mxu0 0
    %525 = vmatprep.subr.bf16.mxu0 0
    %526 = vmatpush1.bf16.msra.mxu0 0
    %527 = vmatprep.subr.bf16.mxu0 0
    %528 = vmatpush1.bf16.msra.mxu0 0
    %529 = vmatprep.subr.bf16.mxu0 0
    %530 = vmatpush1.bf16.msra.mxu0 0
    %531 = vmatprep.subr.bf16.mxu0 0
    %532 = vmatpush1.bf16.msra.mxu0 0
    %533 = vmatprep.subr.bf16.mxu0 0
    %534 = vmatpush1.bf16.msra.mxu0 0
    %535 = vmatprep.subr.bf16.mxu0 0
    %536 = vmatpush1.bf16.msra.mxu0 0
    %537 = vmatprep.subr.bf16.mxu0 0
    %538 = vmatpush1.bf16.msra.mxu0 0
    %539 = vmatprep.mubr.bf16.mxu0 0
    %540 = vmatmul.mubr.bf16.gmra.mrb[0].mxu0 %v505
    %v541 = vpop.f32.mrb[0].mxu0
    %v542 = vadd.f32 %v490, %v541
    %v543 = vpop.f32.mrb[0].mxu0
    %v544 = vpop.f32.mrb[0].mxu0
    %v545 = vpop.f32.mrb[0].mxu0
    %546 = vdwg.mxu0
    %v547 = vmax.f32 %v542, 0.0
    %v548 = vpack.c.bf16 %v547, %v547
    %v549 = vld [vmem:[%s11] sm:$0xf]
    %v550 = vld [vmem:[%s11 + $0x4] sm:$0xf]
    %v551 = vld [vmem:[%s11 + $0x8] sm:$0xf]
    %v552 = vld [vmem:[%s11 + $0xc] sm:$0xf]
    %v553 = vld [vmem:[%s11 + $0x10] sm:$0xf]
    %v554 = vld [vmem:[%s11 + $0x14] sm:$0xf]
    %v555 = vld [vmem:[%s11 + $0x18] sm:$0xf]
    %v556 = vld [vmem:[%s11 + $0x1c] sm:$0xf]
    %v557 = vld [vmem:[%s12] sm:$0x1]
    %v559 = vlaneseq
    %v560 = vshrl.u32 %v559, 7
    %v561 = vsub.s32 0, %v560
    %v562 = vrot.slane %v557, %v561
    %v572 = vunpack.c.l.b16 %v549
    %v573 = vunpack.c.l.b16 %v550
    %v574 = vunpack.c.l.b16 %v551
    %v575 = vunpack.c.l.b16 %v552
    %v576 = vunpack.c.l.b16 %v553
    %v577 = vunpack.c.l.b16 %v554
    %v578 = vunpack.c.l.b16 %v555
    %v579 = vunpack.c.l.b16 %v556
    %v580 = vpack.c.b16 %v573, %v572
    %v581 = vpack.c.b16 %v575, %v574
    %v582 = vpack.c.b16 %v577, %v576
    %v583 = vpack.c.b16 %v579, %v578
    %v589 = vsel %vm365, %v548, 0
    %591 = vmatprep.subr.bf16.mxu0 0
    %592 = vmatpush1.bf16.msra.mxu0 %v580
    %593 = vmatprep.subr.bf16.mxu0 0
    %594 = vmatpush1.bf16.msra.mxu0 %v581
    %595 = vmatprep.subr.bf16.mxu0 0
    %596 = vmatpush1.bf16.msra.mxu0 %v582
    %597 = vmatprep.subr.bf16.mxu0 0
    %598 = vmatpush1.bf16.msra.mxu0 %v583
    %599 = vmatprep.subr.bf16.mxu0 0
    %600 = vmatpush1.bf16.msra.mxu0 0
    %601 = vmatprep.subr.bf16.mxu0 0
    %602 = vmatpush1.bf16.msra.mxu0 0
    %603 = vmatprep.subr.bf16.mxu0 0
    %604 = vmatpush1.bf16.msra.mxu0 0
    %605 = vmatprep.subr.bf16.mxu0 0
    %606 = vmatpush1.bf16.msra.mxu0 0
    %607 = vmatprep.subr.bf16.mxu0 0
    %608 = vmatpush1.bf16.msra.mxu0 0
    %609 = vmatprep.subr.bf16.mxu0 0
    %610 = vmatpush1.bf16.msra.mxu0 0
    %611 = vmatprep.subr.bf16.mxu0 0
    %612 = vmatpush1.bf16.msra.mxu0 0
    %613 = vmatprep.subr.bf16.mxu0 0
    %614 = vmatpush1.bf16.msra.mxu0 0
    %615 = vmatprep.subr.bf16.mxu0 0
    %616 = vmatpush1.bf16.msra.mxu0 0
    %617 = vmatprep.subr.bf16.mxu0 0
    %618 = vmatpush1.bf16.msra.mxu0 0
    %619 = vmatprep.subr.bf16.mxu0 0
    %620 = vmatpush1.bf16.msra.mxu0 0
    %621 = vmatprep.subr.bf16.mxu0 0
    %622 = vmatpush1.bf16.msra.mxu0 0
    %623 = vmatprep.mubr.bf16.mxu0 0
    %624 = vmatmul.mubr.bf16.gmra.mrb[0].mxu0 %v589
    %v625 = vpop.f32.mrb[0].mxu0
    %v626 = vadd.f32 %v562, %v625
    %v627 = vpop.f32.mrb[0].mxu0
    %v628 = vpop.f32.mrb[0].mxu0
    %v629 = vpop.f32.mrb[0].mxu0
    %630 = vdwg.mxu0
    %v631 = vsub.f32 %v626, %v98
    %v632 = vmul.f32 %v631, %v631
    %v633 = vrot.slane %v632, 4
    %v634 = vadd.f32 %v632, %v633
    %v635 = vrot.slane %v634, 2
    %v636 = vadd.f32 %v634, %v635
    %v637 = vrot.slane %v636, 1
    %v638 = vadd.f32 %v636, %v637
    %639 = vst [vmem:[%s14] sm:$0x1] %v638
    // Predicated region
    $region70: #{_lambda_.1} parent=1 // pred_check
      _
    $region71: #{_lambda_.1} parent=1 // pred_check_branch
      %641 = sbr.rel (0) target = $region73
    $region72: #{_lambda_.1} parent=1 // pred_region
      %s643 = ssub.s32 128, 128
      %644 = vsyncadd [#allocation4], %s643
      %s646 = sshll.u32 [#allocation10], 4
      %s647 = int_to_ptr.vmem [resolvable:$true] %s646
      %649 = dma.vmem_to_hbm [thread:$0]  %s647, 128, %s13, [#allocation4]
    $region73: #{_lambda_.1} parent=1 // pred_fallthru
      _
    // Predicated region
    $region74: #{_lambda_.1} parent=1 // pred_check
      _
    $region75: #{_lambda_.1} parent=1 // pred_check_branch
      %651 = sbr.rel (0) target = $region77
    $region76: #{_lambda_.1} parent=1 // pred_region
      _
    $region77: #{_lambda_.1} parent=1 // pred_fallthru
      _
    // Predicated region
    $region78: #{_lambda_.1} parent=1 // pred_check
      _
    $region79: #{_lambda_.1} parent=1 // pred_check_branch
      %653 = sbr.rel (0) target = $region81
    $region80: #{_lambda_.1} parent=1 // pred_region
      %654 = dma.done [#allocation4], 128
    $region81: #{_lambda_.1} parent=1 // pred_fallthru
      _
    // Predicated region
    $region82: #{_lambda_.1} parent=1 // pred_check
      _
    $region83: #{_lambda_.1} parent=1 // pred_check_branch
      %656 = sbr.rel (0) target = $region85
    $region84: #{_lambda_.1} parent=1 // pred_region
      _
    $region85: #{_lambda_.1} parent=1 // pred_fallthru
      _
    %657 = vsyncpa [#allocation3], 1
    %658 = vsyncpa [#allocation6], 1
    %659 = vsyncpa [#allocation9], 1
    %660 = vsyncpa [#allocation4], 1

</llo_original>
